<compile_context>
chip_gen: v7x
topology: tpu7x:2x2x1
jax: 0.10.0
libtpu: 0.0.40
codegen_flags: <defaults>
</compile_context>

<pallas_src>
import jax
import jax.numpy as jnp
from jax.experimental import pallas as pl
from jax.experimental.pallas import tpu as pltpu

KSIZE = 7
PAD = 3  # kernel_size=7 -> padding=3 (matches the PyTorch module)


def _choose_channel_tile(C, HW, itemsize=4, max_block_bytes=4 * 1024 * 1024):
    """Channel tile that divides C, keeps the (double-buffered) x block a few MiB,
    and is a multiple of 8 sublanes unless it covers all of C (Mosaic tiling rule)."""
    max_ct = max(1, max_block_bytes // max(1, HW * itemsize))
    if C <= max_ct:
        return C
    for ct in range(min(C, max_ct), 0, -1):
        if C % ct == 0 and ct % 8 == 0:
            return ct
    return C  # fallback: no channel tiling (still correct, just more VMEM)


def _channel_sum_max_kernel(x_ref, o_ref, sum_ref, max_ref):
    # x_ref : VMEM (1, CT, H*W)  lane-dense channel chunk of one batch element
    # o_ref : VMEM (1, 2, H*W)   [channel-sum, channel-max], written on the last C step
    # sum_ref / max_ref : VMEM (1, H*W) running accumulators (persist across the C axis)
    c = pl.program_id(1)

    @pl.when(c == 0)
    def _init():
        sum_ref[...] = jnp.zeros(sum_ref.shape, sum_ref.dtype)
        max_ref[...] = jnp.full(max_ref.shape, -jnp.inf, max_ref.dtype)

    ct = x_ref.shape[1]
    CH = 8  # one f32 sublane-tile per step keeps the live set tiny (no spills)
    nfull = ct // CH
    rem = ct - nfull * CH

    def body(i, carry):
        s, m = carry
        off = pl.multiple_of(i * CH, CH)
        blk = x_ref[0, pl.ds(off, CH), :]                       # (CH, HW)
        return (s + jnp.sum(blk, axis=0, keepdims=True),
                jnp.maximum(m, jnp.max(blk, axis=0, keepdims=True)))

    s, m = sum_ref[...], max_ref[...]
    if nfull > 0:
        s, m = jax.lax.fori_loop(0, nfull, body, (s, m), unroll=True)
    if rem > 0:
        blk = x_ref[0, pl.ds(nfull * CH, rem), :]               # (rem, HW)
        s = s + jnp.sum(blk, axis=0, keepdims=True)
        m = jnp.maximum(m, jnp.max(blk, axis=0, keepdims=True))
    sum_ref[...] = s
    max_ref[...] = m

    @pl.when(c == pl.num_programs(1) - 1)
    def _finalize():
        o_ref[0, 0, :] = sum_ref[0, :]
        o_ref[0, 1, :] = max_ref[0, :]


def _conv_sigmoid_kernel(w_ref, sm_ref, o_ref, shift_ref):
    # w_ref    : SMEM (2*49,) conv weights; channel 0 (avg) pre-scaled by 1/C.
    # sm_ref   : VMEM (1, 2, Hp, Wp) zero-padded [channel-sum, channel-max] maps.
    # o_ref    : VMEM (1, 1, H, W)
    # shift_ref: VMEM (2, 7, Hp, W) scratch: the 7 kw-shifted copies of each map.
    H = o_ref.shape[2]
    W = o_ref.shape[3]

    sm = sm_ref[0]                                              # (2, Hp, Wp)
    # 7 lane-shifted copies per map, computed once: afterwards every one of the
    # 49 taps is a plain sublane-offset VMEM load (no per-tap lane shuffles).
    for ch in range(2):
        plane = sm[ch]                                          # (Hp, Wp)
        for kw in range(KSIZE):
            shift_ref[ch, kw] = plane[:, kw:kw + W]             # (Hp, W)

    acc = jnp.zeros((H, W), jnp.float32)
    for kh in range(KSIZE):
        for kw in range(KSIZE):
            acc = (acc
                   + w_ref[kh * KSIZE + kw]
                   * shift_ref[0, kw, pl.ds(kh, H), :]
                   + w_ref[KSIZE * KSIZE + kh * KSIZE + kw]
                   * shift_ref[1, kw, pl.ds(kh, H), :])

    o_ref[0, 0] = jax.nn.sigmoid(acc)


def _channel_sum_max(x):
    """(N, C, H, W) f32 -> (N, 2, H*W) f32 holding [channel-sum, channel-max]."""
    N, C, H, W = x.shape
    HW = H * W
    xf = x.reshape(N, C, HW)                                    # free reshape; lane-dense last dim
    ct = _choose_channel_tile(C, HW, jnp.dtype(jnp.float32).itemsize)
    nc = C // ct
    return pl.pallas_call(
        _channel_sum_max_kernel,
        out_shape=jax.ShapeDtypeStruct((N, 2, HW), jnp.float32),
        grid_spec=pltpu.PrefetchScalarGridSpec(
            num_scalar_prefetch=0,
            grid=(N, nc),
            in_specs=[pl.BlockSpec((1, ct, HW), lambda b, c: (b, c, 0))],
            out_specs=pl.BlockSpec((1, 2, HW), lambda b, c: (b, 0, 0)),
            scratch_shapes=[pltpu.VMEM((1, HW), jnp.float32),
                            pltpu.VMEM((1, HW), jnp.float32)],
        ),
        compiler_params=pltpu.CompilerParams(
            dimension_semantics=("parallel", "arbitrary")),
    )(xf)


def spatial_attention(x, conv_w):
    """x: (N, C, H, W) float32; conv_w: (1, 2, 7, 7) float32 (OIHW, no bias)."""
    N, C, H, W = x.shape
    x = x.astype(jnp.float32)

    # Pass 1: streaming channel reduction (lane-dense, C-tiled).
    sum_max = _channel_sum_max(x)

    # Glue (tiny, ~2/C of the input bytes): back to 2-D spatial and zero-pad the
    # 2-channel map only — never the full C-channel tensor.
    sm = sum_max.reshape(N, 2, H, W)
    sm_pad = jnp.pad(sm, ((0, 0), (0, 0), (PAD, PAD), (PAD, PAD)))
    Hp, Wp = H + 2 * PAD, W + 2 * PAD

    # Fold the mean's 1/C into the avg-channel weights: (sum * w/C) == (mean * w).
    w_avg = (conv_w[:, 0].astype(jnp.float32) / C).reshape(-1)
    w_max = conv_w[:, 1].astype(jnp.float32).reshape(-1)
    w_flat = jnp.concatenate([w_avg, w_max])                    # index = in_ch*49 + kh*7 + kw

    # Pass 2: 7x7 conv over the padded 2-channel map + sigmoid.
    # NOTE (v7x): with N == 1 this grid has a single parallel step; split H into
    # halo-ed strips if dual-TensorCore utilisation matters for that case.
    return pl.pallas_call(
        _conv_sigmoid_kernel,
        out_shape=jax.ShapeDtypeStruct((N, 1, H, W), jnp.float32),
        grid_spec=pltpu.PrefetchScalarGridSpec(
            num_scalar_prefetch=0,
            grid=(N,),
            in_specs=[
                pl.BlockSpec(memory_space=pltpu.MemorySpace.SMEM),      # conv weights (scalars)
                pl.BlockSpec((1, 2, Hp, Wp), lambda b: (b, 0, 0, 0)),   # padded [sum, max] maps
            ],
            out_specs=pl.BlockSpec((1, 1, H, W), lambda b: (b, 0, 0, 0)),
            scratch_shapes=[pltpu.VMEM((2, KSIZE, Hp, W), jnp.float32)],
        ),
        compiler_params=pltpu.CompilerParams(
            dimension_semantics=("parallel",)),
    )(w_flat, sm_pad)


def ref_forward(x, conv_w):
    """Pure-JAX reference matching the PyTorch forward."""
    avg = jnp.mean(x, axis=1, keepdims=True)
    mx = jnp.max(x, axis=1, keepdims=True)
    cat = jnp.concatenate([avg, mx], axis=1)
    out = jax.lax.conv_general_dilated(
        cat, conv_w, window_strides=(1, 1),
        padding=((PAD, PAD), (PAD, PAD)),
        dimension_numbers=("NCHW", "OIHW", "NCHW"))
    return jax.nn.sigmoid(out)


if __name__ == "__main__":
    key = jax.random.PRNGKey(0)
    kx, kw = jax.random.split(key)

    N, C, H, W = 2, 4, 16, 16
    x = jax.random.normal(kx, (N, C, H, W), dtype=jnp.float32)
    # Deterministic synthetic conv weight, shape (out=1, in=2, 7, 7), no bias.
    conv_w = 0.1 * jax.random.normal(kw, (1, 2, KSIZE, KSIZE), dtype=jnp.float32)

    out = spatial_attention(x, conv_w)
    out = jax.block_until_ready(out)

    expected = jax.block_until_ready(ref_forward(x, conv_w))
    assert out.shape == (N, 1, H, W)
    assert jnp.allclose(out, expected, atol=1e-4, rtol=1e-4), "mismatch vs reference"

    print("KERNEL_OK")
</pallas_src>

<mosaic_0001>
module attributes {stable_mosaic.version = 11 : i64} {
  func.func @_channel_sum_max_kernel(%arg0: i32, %arg1: i32, %arg2: memref<1x4x256xf32, #tpu.memory_space<vmem>>, %arg3: memref<1x2x256xf32, #tpu.memory_space<vmem>>, %arg4: memref<1x256xf32, #tpu.memory_space<vmem>>, %arg5: memref<1x256xf32, #tpu.memory_space<vmem>>) attributes {dimension_semantics = [#tpu.dimension_semantics<parallel>, #tpu.dimension_semantics<arbitrary>], iteration_bounds = array<i64: 2, 1>, scalar_prefetch = 0 : i64, scratch_operands = 2 : i64, tpu.core_type = #tpu.core_type<tc>, window_params = [{transform_indices = @transform_0, window_bounds = array<i64: 1, 4, 256>}, {transform_indices = @transform_1, window_bounds = array<i64: 1, 2, 256>}]} {
    %c0_i32 = arith.constant 0 : i32
    %0 = arith.cmpi eq, %arg1, %c0_i32 : i32
    %1 = arith.extui %0 : i1 to i32
    %c0_i32_0 = arith.constant 0 : i32
    %2 = arith.cmpi ne, %1, %c0_i32_0 : i32
    scf.if %2 {
      %cst_14 = arith.constant 0.000000e+00 : f32
      %18 = vector.broadcast %cst_14 : f32 to vector<1x256xf32>
      %c0_15 = arith.constant 0 : index
      %c0_16 = arith.constant 0 : index
      %19 = vector.load %arg4[%c0_15, %c0_16] : memref<1x256xf32, #tpu.memory_space<vmem>>, vector<1x256xf32>
      tpu.vector_store %arg4[%c0_15, %c0_16], %18 {strides = array<i32>} : memref<1x256xf32, #tpu.memory_space<vmem>>, vector<1x256xf32>,
      %cst_17 = arith.constant 0xFF800000 : f32
      %20 = vector.broadcast %cst_17 : f32 to vector<1x256xf32>
      %c0_18 = arith.constant 0 : index
      %c0_19 = arith.constant 0 : index
      %21 = vector.load %arg5[%c0_18, %c0_19] : memref<1x256xf32, #tpu.memory_space<vmem>>, vector<1x256xf32>
      tpu.vector_store %arg5[%c0_18, %c0_19], %20 {strides = array<i32>} : memref<1x256xf32, #tpu.memory_space<vmem>>, vector<1x256xf32>,
    } else {
    }
    %c0 = arith.constant 0 : index
    %c0_1 = arith.constant 0 : index
    %3 = vector.load %arg4[%c0, %c0_1] : memref<1x256xf32, #tpu.memory_space<vmem>>, vector<1x256xf32>
    %c0_2 = arith.constant 0 : index
    %c0_3 = arith.constant 0 : index
    %4 = vector.load %arg5[%c0_2, %c0_3] : memref<1x256xf32, #tpu.memory_space<vmem>>, vector<1x256xf32>
    %c0_4 = arith.constant 0 : index
    %c0_5 = arith.constant 0 : index
    %c0_6 = arith.constant 0 : index
    %5 = vector.load %arg2[%c0_4, %c0_5, %c0_6] : memref<1x4x256xf32, #tpu.memory_space<vmem>>, vector<1x4x256xf32>
    %6 = vector.shape_cast %5 : vector<1x4x256xf32> to vector<4x256xf32>
    %cst = arith.constant dense<0.000000e+00> : vector<256xf32>
    %7 = vector.multi_reduction <add>, %6, %cst [0] : vector<4x256xf32> to vector<256xf32>
    %8 = vector.shape_cast %7 : vector<256xf32> to vector<1x256xf32>
    %9 = arith.addf %3, %8 : vector<1x256xf32>
    %cst_7 = arith.constant dense<0xFF800000> : vector<256xf32>
    %10 = vector.multi_reduction <maximumf>, %6, %cst_7 [0] : vector<4x256xf32> to vector<256xf32>
    %11 = vector.shape_cast %10 : vector<256xf32> to vector<1x256xf32>
    %12 = arith.maximumf %4, %11 : vector<1x256xf32>
    %c0_8 = arith.constant 0 : index
    %c0_9 = arith.constant 0 : index
    %13 = vector.load %arg4[%c0_8, %c0_9] : memref<1x256xf32, #tpu.memory_space<vmem>>, vector<1x256xf32>
    tpu.vector_store %arg4[%c0_8, %c0_9], %9 {strides = array<i32>} : memref<1x256xf32, #tpu.memory_space<vmem>>, vector<1x256xf32>,
    %c0_10 = arith.constant 0 : index
    %c0_11 = arith.constant 0 : index
    %14 = vector.load %arg5[%c0_10, %c0_11] : memref<1x256xf32, #tpu.memory_space<vmem>>, vector<1x256xf32>
    tpu.vector_store %arg5[%c0_10, %c0_11], %12 {strides = array<i32>} : memref<1x256xf32, #tpu.memory_space<vmem>>, vector<1x256xf32>,
    %c0_i32_12 = arith.constant 0 : i32
    %15 = arith.cmpi eq, %arg1, %c0_i32_12 : i32
    %16 = arith.extui %15 : i1 to i32
    %c0_i32_13 = arith.constant 0 : i32
    %17 = arith.cmpi ne, %16, %c0_i32_13 : i32
    scf.if %17 {
      %c0_14 = arith.constant 0 : index
      %c0_15 = arith.constant 0 : index
      %18 = vector.load %arg4[%c0_14, %c0_15] : memref<1x256xf32, #tpu.memory_space<vmem>>, vector<1x256xf32>
      %19 = vector.shape_cast %18 : vector<1x256xf32> to vector<256xf32>
      %c0_16 = arith.constant 0 : index
      %c0_17 = arith.constant 0 : index
      %c0_18 = arith.constant 0 : index
      %20 = vector.load %arg3[%c0_16, %c0_17, %c0_18] : memref<1x2x256xf32, #tpu.memory_space<vmem>>, vector<1x1x256xf32>
      %21 = vector.shape_cast %20 : vector<1x1x256xf32> to vector<256xf32>
      %22 = vector.shape_cast %19 : vector<256xf32> to vector<1x1x256xf32>
      tpu.vector_store %arg3[%c0_16, %c0_17, %c0_18], %22 {strides = array<i32>} : memref<1x2x256xf32, #tpu.memory_space<vmem>>, vector<1x1x256xf32>,
      %c0_19 = arith.constant 0 : index
      %c0_20 = arith.constant 0 : index
      %23 = vector.load %arg5[%c0_19, %c0_20] : memref<1x256xf32, #tpu.memory_space<vmem>>, vector<1x256xf32>
      %24 = vector.shape_cast %23 : vector<1x256xf32> to vector<256xf32>
      %c0_21 = arith.constant 0 : index
      %c1 = arith.constant 1 : index
      %c0_22 = arith.constant 0 : index
      %25 = vector.load %arg3[%c0_21, %c1, %c0_22] : memref<1x2x256xf32, #tpu.memory_space<vmem>>, vector<1x1x256xf32>
      %26 = vector.shape_cast %25 : vector<1x1x256xf32> to vector<256xf32>
      %27 = vector.shape_cast %24 : vector<256xf32> to vector<1x1x256xf32>
      tpu.vector_store %arg3[%c0_21, %c1, %c0_22], %27 {strides = array<i32>} : memref<1x2x256xf32, #tpu.memory_space<vmem>>, vector<1x1x256xf32>,
    } else {
    }
    return
  }
  func.func @transform_0(%arg0: i32, %arg1: i32) -> (i32, i32, i32) {
    %c0_i32 = arith.constant 0 : i32
    %c0_i32_0 = arith.constant 0 : i32
    return %arg0, %arg1, %c0_i32 : i32, i32, i32
  }
  func.func @transform_1(%arg0: i32, %arg1: i32) -> (i32, i32, i32) {
    %c0_i32 = arith.constant 0 : i32
    %c0_i32_0 = arith.constant 0 : i32
    %c0_i32_1 = arith.constant 0 : i32
    return %arg0, %c0_i32, %c0_i32_0 : i32, i32, i32
  }
}

</mosaic_0001>

<llo_original>
// kernel: tpu_custom_call.1
$region0: #{tpu_custom_call.1}
  #allocation0 [shape = 'u32[]', space=smem, size = 0x4, offset = 0x4, fixed_abs, tag = 'smem constant byte address 0x4 - core index']
  #allocation1 [shape = 'u32[144,128]{1,0:T(1,128)}', space=vmem, size = 0x12000, scoped, tag = 'internal scratch']
  #allocation2 [shape = 'f32[1,256]{1,0:T(1,128)}', space=vmem, size = 0x400, scoped, tag = 'scratch operand']
  #allocation3 [shape = 'f32[1,256]{1,0:T(1,128)}', space=vmem, size = 0x400, scoped, tag = 'scratch operand']
  %s0 = inlined_call_operand.hbm [shape: f32[2,4,256], index: 0, kind: input, shape index: {}]
  %s1 = inlined_call_operand.hbm [shape: f32[2,2,256], index: 1, kind: output, shape index: {}]
  %s2 = sld [smem:[#allocation0]]
  $region49: #{tpu_custom_call.1} parent=0
    _
  %s4 = ssub.s32 1, %s2
  %s5 = scalar_select 0, %s4, %s2
  $region1: #{tpu_custom_call.1} parent=0
    #allocation4 [shape = 'u8[8192]{0}', space=vmem, size = 0x2000, scoped, tag = 'input window, operand 0']
    #allocation5 [shape = 's32[2]{0}', space=sflag, size = 0x8, scoped, tag = 'scoped memory for tpu_custom_call.1']
    #allocation6 [shape = 's32[2]{0}', space=sflag, size = 0x8, scoped, tag = 'scoped memory for tpu_custom_call.1']
    #allocation7 [shape = 'u8[4096]{0}', space=vmem, size = 0x1000, scoped, tag = 'output window, operand 0']
    %6 = vsyncpa [#allocation5], 0
    %s7 = scalar_lea.sflag [#allocation5], 1
    %8 = vsyncpa %s7, 0
    %9 = vsyncpa [#allocation6], 0
    %s10 = scalar_lea.sflag [#allocation6], 1
    %11 = vsyncpa %s10, 0
    loop: start=0, step=1, limit=4
    $region2: #{tpu_custom_call.1} parent=1 // loop_pre_header
      _
    $region3: #{tpu_custom_call.1} parent=1 // loop_header
      %s13 = sphi 0, %s17
      %p14 = scmp.ge.s32.totalorder %s13, 4
      %s20 = sphi 0, %s32
      %s21 = sphi 0, %s28
      %s22 = sphi 0, %s20
      %s23 = sphi 0, %s21
      %s24 = sphi 0, %s22
      %s25 = sphi 0, %s23
      %s37 = sphi 0, %s39
      %s40 = sphi 0, %s37
      %s41 = sphi 0, %s40
      %s57 = sphi 0, %s41
      %s63 = sphi 0, %s65
      %s66 = sphi 0, %s63
      %s67 = sphi 0, %s66
      %s83 = sphi 0, %s67
    $region4: #{tpu_custom_call.1} parent=1 // loop_header_branch
      %16 = sbr.rel (%p14) target = $region8
    $region5: #{tpu_custom_call.1} parent=1 // loop_body
      %s18 = ssub.s32 %s13, 1
      %s19 = ssub.s32 %s13, 2
      %s26 = sadd.s32 1, %s21
      %p27 = scmp.ge.s32.totalorder %s26, 1
      %s28 = scalar_select %p27, 0, %s26
      %s29 = sadd.s32 1, %s20
      %s30 = scalar_select %p27, %s29, %s20
      %p31 = scmp.ge.s32.totalorder %s30, 2
      %s32 = scalar_select %p31, 0, %s30
      %s33 = ssub.s32 %s20, %s32
      %s34 = ssub.s32 %s21, %s28
      %s35 = sor.u32 %s33, %s34
      %p36 = scmp.eq.s32.totalorder %s35, 0
      %s38 = sadd.s32 %s37, 1
      %s39 = scalar_select %p36, %s37, %s38
      %p42 = pneg %p36
      %p43 = scmp.eq.s32.totalorder %s13, 1
      %p44 = por %p42, %p43
      %p45 = scmp.ne.s32.totalorder %s37, %s40
      %p46 = scmp.eq.s32.totalorder %s13, 0
      %p47 = por %p45, %p46
      %p48 = scmp.ne.s32.totalorder %s37, %s40
      %p49 = scmp.eq.s32.totalorder %s18, 1
      %p50 = por %p48, %p49
      %p51 = scmp.ne.s32.totalorder %s40, %s41
      %p52 = scmp.eq.s32.totalorder %s18, 0
      %p53 = por %p51, %p52
      %p54 = scmp.ne.s32.totalorder %s40, %s41
      %p55 = scmp.eq.s32.totalorder %s19, 1
      %p56 = por %p54, %p55
      %p58 = scmp.ne.s32.totalorder %s41, %s57
      %p59 = scmp.eq.s32.totalorder %s19, 0
      %p60 = por %p58, %p59
      %s61 = ssub.s32 %s20, %s32
      %p62 = scmp.eq.s32.totalorder %s61, 0
      %s64 = sadd.s32 %s63, 1
      %s65 = scalar_select %p62, %s63, %s64
      %p68 = pneg %p62
      %p69 = scmp.eq.s32.totalorder %s13, 1
      %p70 = por %p68, %p69
      %p71 = scmp.ne.s32.totalorder %s63, %s66
      %p72 = scmp.eq.s32.totalorder %s13, 0
      %p73 = por %p71, %p72
      %p74 = scmp.ne.s32.totalorder %s63, %s66
      %p75 = scmp.eq.s32.totalorder %s18, 1
      %p76 = por %p74, %p75
      %p77 = scmp.ne.s32.totalorder %s66, %s67
      %p78 = scmp.eq.s32.totalorder %s18, 0
      %p79 = por %p77, %p78
      %p80 = scmp.ne.s32.totalorder %s66, %s67
      %p81 = scmp.eq.s32.totalorder %s19, 1
      %p82 = por %p80, %p81
      %p84 = scmp.ne.s32.totalorder %s67, %s83
      %p85 = scmp.eq.s32.totalorder %s19, 0
      %p86 = por %p84, %p85
      %p87 = scmp.le.s32.totalorder 1, %s13
      %p88 = scmp.lt.s32.totalorder %s13, 3
      %p89 = pnand %p87, %p88
      %p90 = pneg %p89
      // Predicated region
      $region9: #{tpu_custom_call.1} parent=5 // pred_check
        _
      $region10: #{tpu_custom_call.1} parent=5 // pred_check_branch
        %92 = sbr.rel (%p89) target = $region12
      $region11: #{tpu_custom_call.1} parent=5 // pred_region
        %s93 = ssub.s32 %s13, 1
      $region12: #{tpu_custom_call.1} parent=5 // pred_fallthru
        _
      %p94 = scmp.lt.s32.totalorder %s13, 2
      // Predicated region
      $region13: #{tpu_custom_call.1} parent=5 // pred_check
        %p95 = pneg %p94
      $region14: #{tpu_custom_call.1} parent=5 // pred_check_branch
        %97 = sbr.rel (%p95) target = $region16
      $region15: #{tpu_custom_call.1} parent=5 // pred_region
        // Predicated region
        $region17: #{tpu_custom_call.1} parent=15 // pred_check
          %p98 = pneg %p47
        $region18: #{tpu_custom_call.1} parent=15 // pred_check_branch
          %100 = sbr.rel (%p98) target = $region20
        $region19: #{tpu_custom_call.1} parent=15 // pred_region
          %s101 = sand.u32 %s37, 1
          %s102 = scalar_lea.sflag [#allocation5], %s101
          %s103 = sand.u32 %s37, 1
          %s104 = smul.addr %s103, 8
          %s105 = scalar_lea.vmem [#allocation4], %s104
          %s107 = ssub.s32 128, 128
          %108 = vsyncadd %s102, %s107
          %s109 = smul.addr %s21, 2
          %s110 = smul.addr %s20, 2
          %s111 = sadd.s32 %s109, %s110
          %s112 = smul.addr %s111, 64
          %s113 = scalar_lea.hbm %s0, %s112
          %s115 = sshll.u32 %s105, 4
          %s116 = int_to_ptr.vmem [resolvable:$true] %s115
          %118 = dma.hbm_to_vmem [thread:$0]  %s113, 128, %s116, %s102
        $region20: #{tpu_custom_call.1} parent=15 // pred_fallthru
          _
      $region16: #{tpu_custom_call.1} parent=5 // pred_fallthru
        _
      %p119 = scmp.le.s32.totalorder 1, %s13
      %p120 = scmp.lt.s32.totalorder %s13, 3
      %p121 = pnand %p119, %p120
      %p122 = pneg %p121
      // Predicated region
      $region21: #{tpu_custom_call.1} parent=5 // pred_check
        _
      $region22: #{tpu_custom_call.1} parent=5 // pred_check_branch
        %124 = sbr.rel (%p121) target = $region24
      $region23: #{tpu_custom_call.1} parent=5 // pred_region
        %s125 = ssub.s32 %s13, 1
        %s126 = sand.u32 %s40, 1
        %s127 = scalar_lea.sflag [#allocation5], %s126
        %s128 = sand.u32 %s40, 1
        %s129 = smul.addr %s128, 8
        %s130 = scalar_lea.vmem [#allocation4], %s129
        // Predicated region
        $region25: #{tpu_custom_call.1} parent=23 // pred_check
          %p131 = pneg %p53
        $region26: #{tpu_custom_call.1} parent=23 // pred_check_branch
          %133 = sbr.rel (%p131) target = $region28
        $region27: #{tpu_custom_call.1} parent=23 // pred_region
          %134 = dma.done %s127, 128
        $region28: #{tpu_custom_call.1} parent=23 // pred_fallthru
          _
        %s135 = sand.u32 %s40, 1
        %s136 = scalar_lea.sflag [#allocation5], %s135
        %s137 = sand.u32 %s40, 1
        %s138 = smul.addr %s137, 8
        %s139 = scalar_lea.vmem [#allocation4], %s138
        %p140 = pneg %p53
        %p141 = pneg %p50
        %p142 = pneg %p79
        %p143 = pneg %p76
        %s144 = sand.u32 %s66, 1
        %s145 = scalar_lea.sflag [#allocation6], %s144
        %s146 = sand.u32 %s66, 1
        %s147 = smul.addr %s146, 4
        %s148 = scalar_lea.vmem [#allocation7], %s147
        %p149 = scmp.eq.s32.totalorder %s23, 0
        // Predicated region
        $region29: #{tpu_custom_call.1} parent=23 // pred_check
          %p150 = pneg %p149
        $region30: #{tpu_custom_call.1} parent=23 // pred_check_branch
          %152 = sbr.rel (%p150) target = $region32
        $region31: #{tpu_custom_call.1} parent=23 // pred_region
          %v153 = vlaneseq
          %vm154 = vcmp.ge.s32.totalorder %v153, 0
          %vm155 = vcmp.lt.s32.totalorder %v153, 256
          %vm156 = vmand %vm154, %vm155
          %157 = vst.msk [vmem:[#allocation2] sm:$0x3] %vm156, 0.0
          %158 = vst.msk [vmem:[#allocation3] sm:$0x3] %vm156, -inf
        $region32: #{tpu_custom_call.1} parent=23 // pred_fallthru
          _
        %v159 = vld [vmem:[#allocation2] sm:$0x3]
        %v160 = vld [vmem:[#allocation3] sm:$0x3]
        %v161 = vld [vmem:[%s130] sm:$0xff]
        %v163 = vcombine.high %v161, %v161
        %vm165 = vcmask 1043456
        %v166 = vsel %vm165, %v161, 0.0
        %v167 = vrot.slane %v166, 4
        %v168 = vadd.f32 %v166, %v167
        %v169 = vrot.slane %v168, 2
        %v170 = vadd.f32 %v168, %v169
        %v171 = vrot.slane %v170, 1
        %v172 = vadd.f32 %v170, %v171
        %v173 = vsel %vm165, %v163, 0.0
        %v174 = vrot.slane %v173, 4
        %v175 = vadd.f32 %v173, %v174
        %v176 = vrot.slane %v175, 2
        %v177 = vadd.f32 %v175, %v176
        %v178 = vrot.slane %v177, 1
        %v179 = vadd.f32 %v177, %v178
        %v182 = vcombine.low %v172, %v179
        %v184 = vunpack.c.l.s4 1966171168
        %v185 = vunpack.c.0.s8 %v184
        %v186 = vlaneseq
        %v187 = vshrl.u32 %v186, 7
        %v188 = vsub.s32 %v185, %v187
        %v189 = vrot.slane %v182, %v188
        %v191 = vunpack.c.l.s4 1966171168
        %v192 = vunpack.c.0.s8 %v191
        %v193 = vlaneseq
        %v194 = vshrl.u32 %v193, 7
        %v195 = vsub.s32 %v192, %v194
        %v196 = vrot.slane %v189, %v195
        %v198 = vadd.f32 %v159, %v196
        %v199 = vsel %vm165, %v161, -inf
        %v200 = vrot.slane %v199, 4
        %v201 = vmax.f32 %v199, %v200
        %v202 = vrot.slane %v201, 2
        %v203 = vmax.f32 %v201, %v202
        %v204 = vrot.slane %v203, 1
        %v205 = vmax.f32 %v203, %v204
        %v206 = vsel %vm165, %v163, -inf
        %v207 = vrot.slane %v206, 4
        %v208 = vmax.f32 %v206, %v207
        %v209 = vrot.slane %v208, 2
        %v210 = vmax.f32 %v208, %v209
        %v211 = vrot.slane %v210, 1
        %v212 = vmax.f32 %v210, %v211
        %v215 = vcombine.low %v205, %v212
        %v217 = vunpack.c.l.s4 1966171168
        %v218 = vunpack.c.0.s8 %v217
        %v219 = vlaneseq
        %v220 = vshrl.u32 %v219, 7
        %v221 = vsub.s32 %v218, %v220
        %v222 = vrot.slane %v215, %v221
        %v224 = vunpack.c.l.s4 1966171168
        %v225 = vunpack.c.0.s8 %v224
        %v226 = vlaneseq
        %v227 = vshrl.u32 %v226, 7
        %v228 = vsub.s32 %v225, %v227
        %v229 = vrot.slane %v222, %v228
        %v231 = vmax.f32 %v160, %v229
        %v232 = vlaneseq
        %vm233 = vcmp.ge.s32.totalorder %v232, 0
        %vm234 = vcmp.lt.s32.totalorder %v232, 256
        %vm235 = vmand %vm233, %vm234
        %236 = vst.msk [vmem:[#allocation2] sm:$0x3] %vm235, %v198
        %237 = vst.msk [vmem:[#allocation3] sm:$0x3] %vm235, %v231
        // Predicated region
        $region33: #{tpu_custom_call.1} parent=23 // pred_check
          %p238 = pneg %p149
        $region34: #{tpu_custom_call.1} parent=23 // pred_check_branch
          %240 = sbr.rel (%p238) target = $region36
        $region35: #{tpu_custom_call.1} parent=23 // pred_region
          %v241 = vld [vmem:[#allocation2] sm:$0x3]
          %242 = vst.msk [vmem:[%s148] ss:$2 sm:$0x3] %vm235, %v241
          %v243 = vld [vmem:[#allocation3] sm:$0x3]
          %s244 = scalar_lea.vmem %s148, 1 [#allocation7]
          %245 = vst.msk [vmem:[%s244] ss:$2 sm:$0x3] %vm235, %v243
        $region36: #{tpu_custom_call.1} parent=23 // pred_fallthru
          _
        %s246 = sand.u32 %s66, 1
        %s247 = scalar_lea.sflag [#allocation6], %s246
        %s248 = sand.u32 %s66, 1
        %s249 = smul.addr %s248, 4
        %s250 = scalar_lea.vmem [#allocation7], %s249
        // Predicated region
        $region37: #{tpu_custom_call.1} parent=23 // pred_check
          %p251 = pneg %p76
        $region38: #{tpu_custom_call.1} parent=23 // pred_check_branch
          %253 = sbr.rel (%p251) target = $region40
        $region39: #{tpu_custom_call.1} parent=23 // pred_region
          %s255 = ssub.s32 64, 64
          %256 = vsyncadd %s247, %s255
          %s257 = smul.addr %s22, 2
          %s258 = smul.addr %s257, 32
          %s259 = scalar_lea.hbm %s1, %s258
          %s261 = sshll.u32 %s250, 4
          %s262 = int_to_ptr.vmem [resolvable:$true] %s261
          %264 = dma.vmem_to_hbm [thread:$0]  %s262, 64, %s259, %s247
        $region40: #{tpu_custom_call.1} parent=23 // pred_fallthru
          _
      $region24: #{tpu_custom_call.1} parent=5 // pred_fallthru
        _
      %p265 = scmp.le.s32.totalorder 2, %s13
      // Predicated region
      $region41: #{tpu_custom_call.1} parent=5 // pred_check
        %p266 = pneg %p265
      $region42: #{tpu_custom_call.1} parent=5 // pred_check_branch
        %268 = sbr.rel (%p266) target = $region44
      $region43: #{tpu_custom_call.1} parent=5 // pred_region
        %s269 = ssub.s32 %s13, 2
        // Predicated region
        $region45: #{tpu_custom_call.1} parent=43 // pred_check
          %p270 = pneg %p82
        $region46: #{tpu_custom_call.1} parent=43 // pred_check_branch
          %272 = sbr.rel (%p270) target = $region48
        $region47: #{tpu_custom_call.1} parent=43 // pred_region
          %s273 = sand.u32 %s67, 1
          %s274 = scalar_lea.sflag [#allocation6], %s273
          %s275 = sand.u32 %s67, 1
          %s276 = smul.addr %s275, 4
          %s277 = scalar_lea.vmem [#allocation7], %s276
          %278 = dma.done %s274, 64
        $region48: #{tpu_custom_call.1} parent=43 // pred_fallthru
          _
      $region44: #{tpu_custom_call.1} parent=5 // pred_fallthru
        _
    $region6: #{tpu_custom_call.1} parent=1 // loop_footer
      %s17 = sadd.s32 1, %s13
    $region7: #{tpu_custom_call.1} parent=1 // loop_footer_branch
      %12 = sbr.rel target = $region3
    $region8: #{tpu_custom_call.1} parent=1 // loop_exit
      _
    %279 = vsyncpa [#allocation5], 1
    %s280 = scalar_lea.sflag [#allocation5], 1
    %281 = vsyncpa %s280, 1
    %282 = vsyncpa [#allocation6], 1
    %s283 = scalar_lea.sflag [#allocation6], 1
    %284 = vsyncpa %s283, 1

</llo_original>
